<compile_context>
chip_gen: v7x
topology: tpu7x:2x2x1
jax: 0.10.0
libtpu: 0.0.40
codegen_flags: <defaults>
</compile_context>

<pallas_src>
import jax
import jax.numpy as jnp
from jax.experimental import pallas as pl
from jax.experimental.pallas import tpu as pltpu
from math import log


# --------------------------------------------------------------------------- #
# Pallas kernel: per-row broadcast add over the spatial (lane) axis.
# --------------------------------------------------------------------------- #
def _broadcast_add_kernel(x_ref, temb_ref, y_ref):
    """x_ref: (TR, THW) input tile, temb_ref: (TR, 1) f32, y_ref: (TR, THW).

    Pure VPU elementwise work; the (TR, 1) embedding splats across the 128-lane axis.
    Compute in f32, cast back to the output dtype on store.
    """
    y_ref[...] = (x_ref[...].astype(jnp.float32) + temb_ref[...]).astype(y_ref.dtype)


# --------------------------------------------------------------------------- #
# Glue: sinusoidal timestep embedding + tiny conditioning MLP (plain JAX).
# --------------------------------------------------------------------------- #
def sinusoidal_embedding(t, emb_dim):
    """Classic sinusoidal timestep embedding, shape (B, emb_dim). emb_dim must be even."""
    assert emb_dim % 2 == 0, "sinusoidal embedding dim must be even"
    half = emb_dim // 2
    freqs = jnp.exp(-log(10000.0) * jnp.arange(half, dtype=jnp.float32) / max(half - 1, 1))
    args = t[:, None].astype(jnp.float32) * freqs[None, :]
    return jnp.concatenate([jnp.sin(args), jnp.cos(args)], axis=-1)


def _time_mlp(t, params):
    """(B,) timestep -> (B, C) per-channel embedding. Hoisted out of the Pallas kernel
    (an MXU matmul at (B,32)@(32,64) would run at <1% utilization and add 4 DMA streams)."""
    w1, b1, w2, b2 = params
    temb0 = sinusoidal_embedding(t, w1.shape[0])          # (B, E)
    h = temb0 @ w1 + b1                                   # (B, D)
    h = h * jax.nn.sigmoid(h)                             # SiLU
    return (h @ w2 + b2).astype(jnp.float32)              # (B, C)


# --------------------------------------------------------------------------- #
# Tiling helpers.
# --------------------------------------------------------------------------- #
def _pick_tile(total, unit, cap):
    """Pick a tile size along one axis.

    - If the whole extent fits under `cap`, use the full extent (always a legal block).
    - Otherwise prefer the largest multiple of `unit` <= cap that evenly divides `total`
      (avoids partial blocks); fall back to the largest multiple of `unit` <= cap.
    """
    if total <= cap:
        return total
    tile = (cap // unit) * unit
    for cand in range(tile, unit - 1, -unit):
        if total % cand == 0:
            return cand
    return max(tile, unit)


def _vmem_budget():
    """Per-generation (tile_bytes_cap, vmem_limit_bytes_or_None).

    Resident footprint is ~4 x tile (double-buffered input + output); keep it well under
    the scoped VMEM limit of each generation.
    """
    try:
        capacity = pltpu.get_tpu_info().vmem_capacity_bytes
    except Exception:
        capacity = None
    if capacity is None:
        # Unknown chip: 2 MiB tiles (4x2 = 8 MiB) fit every generation's scoped default.
        return 2 << 20, None
    if capacity <= (64 << 20):
        # v7x: 64 MiB physical / 32 MiB scoped default -> 4 MiB tiles, 16 MiB resident.
        return 4 << 20, 32 << 20
    # v5e / v6e: 128 MiB physical -> 8 MiB tiles, 32 MiB resident, raise scoped limit.
    return 8 << 20, 48 << 20


# --------------------------------------------------------------------------- #
# Forward wrapper mirroring ModuleWrapper.forward((x, t)) -> tensor.
# --------------------------------------------------------------------------- #
def time_embedding_forward(x_nchw, t, params, *, min_pallas_bytes=1 << 20):
    B, C, H, W = x_nchw.shape
    rows, hw = B * C, H * W

    temb = _time_mlp(t, params)                 # (B, C) f32, computed once (glue)
    temb2 = temb.reshape(rows, 1)               # one scalar per (B, C) row
    x2 = x_nchw.reshape(rows, hw)               # spatial on the lane axis; dtype preserved

    itemsize = jnp.dtype(x2.dtype).itemsize

    # Fast path: for tiny inputs the pallas_call launch + single-step pipeline overhead
    # (several microseconds) dwarfs the work; XLA fuses this add fine.
    if rows * hw * itemsize < min_pallas_bytes:
        y2 = (x2.astype(jnp.float32) + temb2).astype(x2.dtype)
        return y2.reshape(B, C, H, W)

    tile_bytes_cap, vmem_limit = _vmem_budget()
    row_unit = 8 * max(1, 4 // itemsize)        # sublane packing: 8 f32, 16 bf16, 32 int8/fp8
    tile_hw = _pick_tile(hw, 128, 4096)         # lane-dense, unmasked output stores
    rows_cap = max(row_unit, tile_bytes_cap // max(1, tile_hw * itemsize))
    tile_r = _pick_tile(rows, row_unit, rows_cap)
    grid = (pl.cdiv(rows, tile_r), pl.cdiv(hw, tile_hw))

    cp_kwargs = dict(dimension_semantics=("parallel", "parallel"))
    if vmem_limit is not None:
        cp_kwargs["vmem_limit_bytes"] = vmem_limit

    y2 = pl.pallas_call(
        _broadcast_add_kernel,
        out_shape=jax.ShapeDtypeStruct((rows, hw), x2.dtype),
        grid=grid,
        in_specs=[
            pl.BlockSpec((tile_r, tile_hw), lambda i, j: (i, j)),
            pl.BlockSpec((tile_r, 1), lambda i, j: (i, 0)),   # temb resident across j
        ],
        out_specs=pl.BlockSpec((tile_r, tile_hw), lambda i, j: (i, j)),
        compiler_params=pltpu.CompilerParams(**cp_kwargs),
        cost_estimate=pl.CostEstimate(
            flops=rows * hw,
            transcendentals=0,
            bytes_accessed=2 * rows * hw * itemsize + rows * 4),
        input_output_aliases={0: 0},            # reuse x's HBM buffer when donated
    )(x2, temb2)

    # TODO(synk): GeometricTensor unwrap has no Pallas equivalent (pure Python attr access); returned plain array.
    return y2.reshape(B, C, H, W)


# --------------------------------------------------------------------------- #
# Pure-JAX reference for correctness checking.
# --------------------------------------------------------------------------- #
def _reference(x_nchw, t, params):
    temb = _time_mlp(t, params)
    return (x_nchw.astype(jnp.float32) + temb[:, :, None, None]).astype(x_nchw.dtype)


if __name__ == "__main__":
    B, C, H, W = 2, 8, 16, 16
    E, D = 32, 64  # sinusoidal embedding dim, hidden time dim

    key = jax.random.PRNGKey(0)
    kx, kt, k1, k2 = jax.random.split(key, 4)

    x = jax.random.normal(kx, (B, C, H, W), dtype=jnp.float32)
    t = jax.random.uniform(kt, (B,), minval=0.0, maxval=1000.0, dtype=jnp.float32)

    # Deterministic parameter init (shapes implied by the time-embedding MLP).
    w1 = jax.random.normal(k1, (E, D), dtype=jnp.float32) * (1.0 / jnp.sqrt(E))
    b1 = jnp.zeros((1, D), dtype=jnp.float32)
    w2 = jax.random.normal(k2, (D, C), dtype=jnp.float32) * (1.0 / jnp.sqrt(D))
    b2 = jnp.zeros((1, C), dtype=jnp.float32)
    params = (w1, b1, w2, b2)

    y_ref = jax.block_until_ready(_reference(x, t, params))

    # Exercise the Pallas path explicitly (demo shape is below the fast-path threshold).
    y_pallas = jax.block_until_ready(
        time_embedding_forward(x, t, params, min_pallas_bytes=0))
    # Default path (small-input fast path) for completeness.
    y_fast = jax.block_until_ready(time_embedding_forward(x, t, params))

    assert y_pallas.shape == (B, C, H, W)
    assert jnp.allclose(y_pallas, y_ref, atol=1e-4, rtol=1e-4), "Pallas path mismatch vs reference"
    assert jnp.allclose(y_fast, y_ref, atol=1e-4, rtol=1e-4), "fast path mismatch vs reference"

    print("KERNEL_OK")
</pallas_src>

<mosaic_0001>
module attributes {stable_mosaic.version = 11 : i64} {
  func.func @_broadcast_add_kernel(%arg0: i32, %arg1: i32, %arg2: memref<16x256xf32, #tpu.memory_space<vmem>>, %arg3: memref<16x1xf32, #tpu.memory_space<vmem>>, %arg4: memref<16x256xf32, #tpu.memory_space<vmem>>) attributes {dimension_semantics = [#tpu.dimension_semantics<parallel>, #tpu.dimension_semantics<parallel>], iteration_bounds = array<i64: 1, 1>, scalar_prefetch = 0 : i64, scratch_operands = 0 : i64, tpu.core_type = #tpu.core_type<tc>, window_params = [{transform_indices = @transform_0, window_bounds = array<i64: 16, 256>}, {transform_indices = @transform_1, window_bounds = array<i64: 16, 1>}, {transform_indices = @transform_2, window_bounds = array<i64: 16, 256>}]} {
    %c0 = arith.constant 0 : index
    %c0_0 = arith.constant 0 : index
    %0 = vector.load %arg2[%c0, %c0_0] : memref<16x256xf32, #tpu.memory_space<vmem>>, vector<16x256xf32>
    %c0_1 = arith.constant 0 : index
    %c0_2 = arith.constant 0 : index
    %1 = vector.load %arg3[%c0_1, %c0_2] : memref<16x1xf32, #tpu.memory_space<vmem>>, vector<16x1xf32>
    %2 = vector.broadcast %1 : vector<16x1xf32> to vector<16x256xf32>
    %3 = arith.addf %0, %2 : vector<16x256xf32>
    %c0_3 = arith.constant 0 : index
    %c0_4 = arith.constant 0 : index
    %4 = vector.load %arg4[%c0_3, %c0_4] : memref<16x256xf32, #tpu.memory_space<vmem>>, vector<16x256xf32>
    tpu.vector_store %arg4[%c0_3, %c0_4], %3 {strides = array<i32>} : memref<16x256xf32, #tpu.memory_space<vmem>>, vector<16x256xf32>,
    return
  }
  func.func @transform_0(%arg0: i32, %arg1: i32) -> (i32, i32) {
    %c0_i32 = arith.constant 0 : i32
    return %arg0, %arg1 : i32, i32
  }
  func.func @transform_1(%arg0: i32, %arg1: i32) -> (i32, i32) {
    %c0_i32 = arith.constant 0 : i32
    %c0_i32_0 = arith.constant 0 : i32
    return %arg0, %c0_i32 : i32, i32
  }
  func.func @transform_2(%arg0: i32, %arg1: i32) -> (i32, i32) {
    %c0_i32 = arith.constant 0 : i32
    return %arg0, %arg1 : i32, i32
  }
}

</mosaic_0001>

<llo_original>
// kernel: tpu_custom_call.1
$region0: #{tpu_custom_call.1}
  #allocation0 [shape = 'u32[]', space=smem, size = 0x4, offset = 0x4, fixed_abs, tag = 'smem constant byte address 0x4 - core index']
  #allocation1 [shape = 'u32[144,128]{1,0:T(1,128)}', space=vmem, size = 0x12000, scoped, tag = 'internal scratch']
  %s0 = inlined_call_operand.hbm [shape: f32[16,256], index: 0, kind: input, shape index: {}, may-alias: {0,2}]
  %s1 = inlined_call_operand.vmem [shape: f32[16,1], index: 1, kind: input, shape index: {}]
  %s2 = inlined_call_operand.hbm [shape: f32[16,256], index: 2, kind: output, shape index: {}, may-alias: {0,2}]
  %s3 = sld [smem:[#allocation0]]
  $region22: #{tpu_custom_call.1} parent=0
    _
  %s5 = ssub.s32 1, %s3
  %s6 = scalar_select 0, %s5, %s3
  $region1: #{tpu_custom_call.1} parent=0
    #allocation2 [shape = 'u8[16384]{0}', space=vmem, size = 0x4000, scoped, tag = 'input window, operand 0, single buffered']
    #allocation3 [shape = 's32[1]{0}', space=sflag, size = 0x4, scoped, tag = 'scoped memory for tpu_custom_call.1']
    #allocation4 [shape = 's32[1]{0}', space=sflag, size = 0x4, scoped, tag = 'scoped memory for tpu_custom_call.1']
    #allocation5 [shape = 'u8[16384]{0}', space=vmem, size = 0x4000, scoped, tag = 'output window, operand 0, single buffered']
    %7 = vsyncpa [#allocation3], 0
    %8 = vsyncpa [#allocation4], 0
    // Predicated region
    $region2: #{tpu_custom_call.1} parent=1 // pred_check
      _
    $region3: #{tpu_custom_call.1} parent=1 // pred_check_branch
      %10 = sbr.rel (0) target = $region5
    $region4: #{tpu_custom_call.1} parent=1 // pred_region
      %s12 = ssub.s32 512, 512
      %13 = vsyncadd [#allocation3], %s12
      %s14 = sshll.u32 [#allocation2], 4
      %s15 = int_to_ptr.vmem [resolvable:$true] %s14
      %20 = dma.hbm_to_vmem [thread:$0]  %s0, 512, %s15, [#allocation3], 256, 256, 16
    $region5: #{tpu_custom_call.1} parent=1 // pred_fallthru
      _
    // Predicated region
    $region6: #{tpu_custom_call.1} parent=1 // pred_check
      _
    $region7: #{tpu_custom_call.1} parent=1 // pred_check_branch
      %22 = sbr.rel (0) target = $region9
    $region8: #{tpu_custom_call.1} parent=1 // pred_region
      _
    $region9: #{tpu_custom_call.1} parent=1 // pred_fallthru
      _
    // Predicated region
    $region10: #{tpu_custom_call.1} parent=1 // pred_check
      _
    $region11: #{tpu_custom_call.1} parent=1 // pred_check_branch
      %24 = sbr.rel (0) target = $region13
    $region12: #{tpu_custom_call.1} parent=1 // pred_region
      %25 = dma.done [#allocation3], 512
    $region13: #{tpu_custom_call.1} parent=1 // pred_fallthru
      _
    %v26 = vld [vmem:[#allocation2] sm:$0xff]
    %v27 = vld [vmem:[#allocation2 + $0x8] sm:$0xff]
    %v28 = vld [vmem:[#allocation2 + $0x10] sm:$0xff]
    %v29 = vld [vmem:[#allocation2 + $0x18] sm:$0xff]
    %v30 = vld [vmem:[%s1] sm:$0xff]
    %v31 = vld [vmem:[%s1 + $0x8] sm:$0xff]
    %33 = vset.pattern.permute.xlu0 0
    %34 = vperm.xlu0 %33, %v30
    %v35 = vpop.permute.xlu0 %34
    %38 = vset.pattern.permute.xlu0 0
    %39 = vperm.xlu0 %38, %v31
    %v40 = vpop.permute.xlu0 %39
    %v42 = vadd.f32 %v26, %v35
    %v43 = vadd.f32 %v27, %v35
    %v44 = vadd.f32 %v28, %v40
    %v45 = vadd.f32 %v29, %v40
    %46 = vst [vmem:[#allocation5] sm:$0xff] %v42
    %47 = vst [vmem:[#allocation5 + $0x8] sm:$0xff] %v43
    %48 = vst [vmem:[#allocation5 + $0x10] sm:$0xff] %v44
    %49 = vst [vmem:[#allocation5 + $0x18] sm:$0xff] %v45
    // Predicated region
    $region14: #{tpu_custom_call.1} parent=1 // pred_check
      _
    $region15: #{tpu_custom_call.1} parent=1 // pred_check_branch
      %51 = sbr.rel (0) target = $region17
    $region16: #{tpu_custom_call.1} parent=1 // pred_region
      %s53 = ssub.s32 512, 512
      %54 = vsyncadd [#allocation4], %s53
      %s55 = sshll.u32 [#allocation5], 4
      %s56 = int_to_ptr.vmem [resolvable:$true] %s55
      %61 = dma.vmem_to_hbm [thread:$0]  %s56, 512, %s2, [#allocation4], 256, 256, 16
    $region17: #{tpu_custom_call.1} parent=1 // pred_fallthru
      _
    // Predicated region
    $region18: #{tpu_custom_call.1} parent=1 // pred_check
      _
    $region19: #{tpu_custom_call.1} parent=1 // pred_check_branch
      %63 = sbr.rel (0) target = $region21
    $region20: #{tpu_custom_call.1} parent=1 // pred_region
      %64 = dma.done [#allocation4], 512
    $region21: #{tpu_custom_call.1} parent=1 // pred_fallthru
      _
    %65 = vsyncpa [#allocation3], 1
    %66 = vsyncpa [#allocation4], 1

</llo_original>
